<compile_context>
chip_gen: v7x
topology: tpu7x:2x2x1
jax: 0.10.0
libtpu: 0.0.40
codegen_flags: <defaults>
</compile_context>

<pallas_src>
import jax
import jax.numpy as jnp
from jax import lax
from jax.experimental import pallas as pl
from jax.experimental.pallas import tpu as pltpu


def _round_up(x, m):
    return ((x + m - 1) // m) * m


# -----------------------------------------------------------------------------
# Fused generator head:  out = log_softmax(x @ W^T + b, axis=-1)
#
# Single pass over vocab tiles:
#   * bf16 MXU matmul (f32 accumulation); W streamed in its native [V, H]
#     layout as (tv, H) tiles — no HBM transpose of the weight.
#   * raw f32 logits tiles are written into the VMEM-resident output slab
#     (the output block index is constant along the vocab grid axis, so the
#     (tm, v_pad) block stays in VMEM across the whole vocab loop).
#   * online (flash-style) running max / sum in VMEM scratch; on the final
#     vocab tile the slab is normalized in place and written to HBM once.
# -----------------------------------------------------------------------------
def _generator_kernel(x_ref, w_ref, b_ref, o_ref, m_sc, l_sc):
    j = pl.program_id(1)
    tv = w_ref.shape[0]

    @pl.when(j == 0)
    def _():
        m_sc[...] = jnp.full_like(m_sc[...], -jnp.inf)
        l_sc[...] = jnp.zeros_like(l_sc[...])

    # (tm, H) x (tv, H) -> (tm, tv), contracting the hidden axis of both.
    logits = lax.dot_general(
        x_ref[...], w_ref[...],
        dimension_numbers=(((1,), (1,)), ((), ())),
        preferred_element_type=jnp.float32) + b_ref[...]

    # Stash the raw logits tile into the resident output slab (lane-dense,
    # 128-aligned dynamic column offset).
    col = pl.multiple_of(j * tv, 128)
    o_ref[:, pl.ds(col, tv)] = logits.astype(o_ref.dtype)

    # Online logsumexp across vocab tiles (f32 math in VMEM scratch).
    m_prev = m_sc[...]
    m_new = jnp.maximum(m_prev, jnp.max(logits, axis=-1, keepdims=True))
    l_sc[...] = (l_sc[...] * jnp.exp(m_prev - m_new)
                 + jnp.sum(jnp.exp(logits - m_new), axis=-1, keepdims=True))
    m_sc[...] = m_new

    @pl.when(j == pl.num_programs(1) - 1)
    def _():
        lse = m_sc[...] + jnp.log(l_sc[...])
        o_ref[...] = (o_ref[...].astype(jnp.float32) - lse).astype(o_ref.dtype)


# -----------------------------------------------------------------------------
# One-time generator parameter preparation (hoisted out of the per-call path).
# -----------------------------------------------------------------------------
def prepare_generator(weight, bias, *, vocab_tile=1024):
    """Pad + bf16-cast the generator weight/bias ONCE and cache the result.

    weight: [V, H] (PyTorch Linear layout), bias: [V].
    """
    v, h = weight.shape
    v_aligned = _round_up(v, 128)
    tv = min(_round_up(vocab_tile, 128), v_aligned)
    v_pad = _round_up(v_aligned, tv)

    w_p = jnp.zeros((v_pad, h), jnp.bfloat16).at[:v].set(
        weight.astype(jnp.bfloat16))
    # Padded vocab columns get a very negative bias so exp() contributes 0.
    # Every vocab tile contains >= 1 real column (tv is a multiple of 128 and
    # any 128-multiple below v_aligned is < v), so the running max is never
    # poisoned by an all-padding tile.
    b_p = jnp.full((1, v_pad), -1e30, jnp.float32).at[0, :v].set(
        bias.astype(jnp.float32))
    return dict(w=w_p, b=b_p, v=v, h=h, tv=tv, v_pad=v_pad)


def generator_forward(x, gen, *, row_tile=256, out_dtype=jnp.float32,
                      vmem_budget_bytes=48 << 20):
    """log_softmax(x @ weight.T + bias, axis=-1) using the fused Pallas kernel.

    x: [N, H] float. gen: dict from prepare_generator(). Returns [N, V].
    """
    n, h = x.shape
    assert h == gen["h"]
    v, tv, v_pad = gen["v"], gen["tv"], gen["v_pad"]
    w_p, b_p = gen["w"], gen["b"]

    out_bytes = jnp.dtype(out_dtype).itemsize

    # Adaptive row tile: 16-row (bf16 sublane) alignment, capped by row_tile;
    # a small-N decode step is not padded up to a full 128/256-row MXU tile.
    tm = min(_round_up(row_tile, 16), _round_up(max(n, 1), 16))

    def vmem_est(tm_):
        return (2 * tm_ * v_pad * out_bytes   # resident out slab (dbl-buffered)
                + 2 * tv * h * 2              # W tiles, bf16, dbl-buffered
                + 2 * tm_ * h * 2             # x tiles, bf16
                + 2 * tv * 4                  # bias tiles
                + 2 * tm_ * 4)                # running max / sum scratch

    # v7x has only 64 MiB of VMEM: shrink the row tile until the resident
    # logits slab plus the double-buffered streams fit the budget.
    while tm > 16 and vmem_est(tm) > vmem_budget_bytes:
        tm = max(16, _round_up(tm // 2, 16))

    n_pad = _round_up(max(n, 1), tm)
    x_p = jnp.zeros((n_pad, h), jnp.bfloat16).at[:n].set(x.astype(jnp.bfloat16))

    grid = (n_pad // tm, v_pad // tv)
    vmem_limit = int(min(max(2 * vmem_est(tm), 32 << 20), 100 << 20))

    out = pl.pallas_call(
        _generator_kernel,
        out_shape=jax.ShapeDtypeStruct((n_pad, v_pad), out_dtype),
        grid_spec=pltpu.PrefetchScalarGridSpec(
            num_scalar_prefetch=0,
            grid=grid,
            in_specs=[
                pl.BlockSpec((tm, h), lambda i, j: (i, 0)),    # x row tile
                pl.BlockSpec((tv, h), lambda i, j: (j, 0)),    # W tile ([V, H])
                pl.BlockSpec((1, tv), lambda i, j: (0, j)),    # bias tile
            ],
            out_specs=pl.BlockSpec((tm, v_pad), lambda i, j: (i, 0)),
            scratch_shapes=[pltpu.VMEM((tm, 1), jnp.float32),  # running max
                            pltpu.VMEM((tm, 1), jnp.float32)], # running sum
        ),
        compiler_params=pltpu.CompilerParams(
            dimension_semantics=("parallel", "arbitrary"),
            vmem_limit_bytes=vmem_limit),
        cost_estimate=pl.CostEstimate(
            flops=2 * n_pad * v_pad * h,
            transcendentals=n_pad * v_pad,
            bytes_accessed=(x_p.size * 2 + w_p.size * 2 + b_p.size * 4
                            + n_pad * v_pad * out_bytes)),
    )(x_p, w_p, b_p)

    if n_pad == n and v_pad == v:
        return out                      # no extra N*V copy when no padding
    return out[:n, :v]


# -----------------------------------------------------------------------------
# Deterministic parameter init (xavier_uniform_ for dim > 1, zeros for bias),
# mirroring the module's __init__ when checkpoint is None.
# -----------------------------------------------------------------------------
def xavier_uniform(key, shape, dtype=jnp.float32):
    fan_in, fan_out = shape[1], shape[0]
    bound = (6.0 / (fan_in + fan_out)) ** 0.5
    return jax.random.uniform(key, shape, dtype=dtype, minval=-bound, maxval=bound)


def make_summarizer_params(key, *, vocab_size, emb_size, dec_hidden_size,
                           padding_idx, share_embeddings=True,
                           share_decoder_embeddings=True):
    k_src, k_tgt, k_gen = jax.random.split(key, 3)
    src_emb = xavier_uniform(k_src, (vocab_size, emb_size))
    src_emb = src_emb.at[padding_idx].set(0.0)      # padding_idx row = 0
    if share_embeddings:
        tgt_emb = src_emb
    else:
        tgt_emb = xavier_uniform(k_tgt, (vocab_size, emb_size))
        tgt_emb = tgt_emb.at[padding_idx].set(0.0)
    if share_decoder_embeddings:
        assert emb_size == dec_hidden_size
        gen_w = tgt_emb                              # weight tying: [V, H]
    else:
        gen_w = xavier_uniform(k_gen, (vocab_size, dec_hidden_size))
    gen_b = jnp.zeros((vocab_size,), jnp.float32)
    return dict(src_emb=src_emb, tgt_emb=tgt_emb, gen_w=gen_w, gen_b=gen_b)


# -----------------------------------------------------------------------------
# Summarizer.forward equivalent for the parts that are defined in-source.
# -----------------------------------------------------------------------------
def summarizer_forward(params, gen, src_tokens, tgt_tokens, *, n_paras=20):
    # tgt = tgt[:-1]   (OpenNMT convention: tgt is [tgt_len, batch])
    tgt = tgt_tokens[:-1]
    tgt_len, batch = tgt.shape

    # graph -> paragraph-node token matrix; replicate the shape bookkeeping
    paras_in_one_batch, n_tokens = src_tokens.shape
    assert paras_in_one_batch % n_paras == 0
    batch_size = paras_in_one_batch // n_paras
    src = src_tokens.reshape(batch_size, n_paras, n_tokens)
    del src  # TODO(synk): HMEncoder(graph) / decoder init state not defined in the given source.

    # target-side embedding lookup (glue gather; padding row is zero)
    tgt_emb = jnp.take(params["tgt_emb"], tgt, axis=0)       # [tgt_len, batch, H]

    # TODO(synk): TransformerDecoder layers are undefined; hidden states here
    # are the (tied-dim) target embeddings fed straight to the generator head.
    hidden = tgt_emb.reshape(tgt_len * batch, -1)            # [N, H]

    log_probs = generator_forward(hidden, gen)
    return log_probs.reshape(tgt_len, batch, -1)             # [tgt_len-1, batch, V]


# -----------------------------------------------------------------------------
if __name__ == "__main__":
    key = jax.random.PRNGKey(0)

    VOCAB = 128
    EMB = 32            # emb_size == dec_hidden_size (weight tying)
    DEC_HIDDEN = 32
    PAD = 0
    BATCH = 2
    N_PARAS = 20
    N_TOKENS = 6
    TGT_LEN = 9         # tgt[:-1] -> 8 steps; 8*BATCH = 16 rows (adaptive tile)

    kp, ks, kt = jax.random.split(key, 3)
    params = make_summarizer_params(
        kp, vocab_size=VOCAB, emb_size=EMB, dec_hidden_size=DEC_HIDDEN,
        padding_idx=PAD, share_embeddings=True, share_decoder_embeddings=True)

    # One-time weight pad/cast (hoisted out of the forward path).
    gen = prepare_generator(params["gen_w"], params["gen_b"], vocab_tile=1024)

    # paragraph-node tokens (what graph.nodes[pnode_id].data['tokens'] yields)
    src_tokens = jax.random.randint(ks, (BATCH * N_PARAS, N_TOKENS), 1, VOCAB,
                                    dtype=jnp.int32)
    # target token ids, [tgt_len, batch]
    tgt_tokens = jax.random.randint(kt, (TGT_LEN, BATCH), 1, VOCAB,
                                    dtype=jnp.int32)

    out = summarizer_forward(params, gen, src_tokens, tgt_tokens, n_paras=N_PARAS)
    out = jax.block_until_ready(out)

    assert out.shape == (TGT_LEN - 1, BATCH, VOCAB)

    # sanity: rows of log-probs must sum to 1 in prob space
    row_sums = jnp.exp(out.astype(jnp.float32)).sum(-1)
    assert bool(jnp.all(jnp.abs(row_sums - 1.0) < 1e-3))

    # cross-check against a pure-JAX reference with MATCHING precision:
    # bf16 operands, f32 accumulation (same as the kernel's MXU path).
    hidden_ref = jnp.take(params["tgt_emb"], tgt_tokens[:-1], axis=0).reshape(-1, EMB)
    logits_ref = lax.dot_general(
        hidden_ref.astype(jnp.bfloat16),
        params["gen_w"].astype(jnp.bfloat16),
        dimension_numbers=(((1,), (1,)), ((), ())),
        preferred_element_type=jnp.float32) + params["gen_b"][None, :]
    ref = jax.nn.log_softmax(logits_ref, axis=-1).reshape(TGT_LEN - 1, BATCH, VOCAB)
    max_err = float(jnp.max(jnp.abs(out.astype(jnp.float32) - ref)))
    assert max_err < 2e-3, max_err

    print("KERNEL_OK")
</pallas_src>

<mosaic_0001>
module attributes {stable_mosaic.version = 11 : i64} {
  func.func @_generator_kernel(%arg0: i32, %arg1: i32, %arg2: memref<16x32xbf16, #tpu.memory_space<vmem>>, %arg3: memref<128x32xbf16, #tpu.memory_space<vmem>>, %arg4: memref<1x128xf32, #tpu.memory_space<vmem>>, %arg5: memref<16x128xf32, #tpu.memory_space<vmem>>, %arg6: memref<16x1xf32, #tpu.memory_space<vmem>>, %arg7: memref<16x1xf32, #tpu.memory_space<vmem>>) attributes {dimension_semantics = [#tpu.dimension_semantics<parallel>, #tpu.dimension_semantics<arbitrary>], iteration_bounds = array<i64: 1, 1>, scalar_prefetch = 0 : i64, scratch_operands = 2 : i64, tpu.core_type = #tpu.core_type<tc>, window_params = [{transform_indices = @transform_0, window_bounds = array<i64: 16, 32>}, {transform_indices = @transform_1, window_bounds = array<i64: 128, 32>}, {transform_indices = @transform_2, window_bounds = array<i64: 1, 128>}, {transform_indices = @transform_3, window_bounds = array<i64: 16, 128>}]} {
    %c0_i32 = arith.constant 0 : i32
    %0 = arith.cmpi eq, %arg1, %c0_i32 : i32
    %1 = arith.extui %0 : i1 to i32
    %c0_i32_0 = arith.constant 0 : i32
    %2 = arith.cmpi ne, %1, %c0_i32_0 : i32
    scf.if %2 {
      %cst_19 = arith.constant 0xFF800000 : f32
      %32 = vector.broadcast %cst_19 : f32 to vector<16x1xf32>
      %c0_20 = arith.constant 0 : index
      %c0_21 = arith.constant 0 : index
      %33 = vector.load %arg6[%c0_20, %c0_21] : memref<16x1xf32, #tpu.memory_space<vmem>>, vector<16x1xf32>
      tpu.vector_store %arg6[%c0_20, %c0_21], %32 {strides = array<i32>} : memref<16x1xf32, #tpu.memory_space<vmem>>, vector<16x1xf32>,
      %cst_22 = arith.constant 0.000000e+00 : f32
      %34 = vector.broadcast %cst_22 : f32 to vector<16x1xf32>
      %c0_23 = arith.constant 0 : index
      %c0_24 = arith.constant 0 : index
      %35 = vector.load %arg7[%c0_23, %c0_24] : memref<16x1xf32, #tpu.memory_space<vmem>>, vector<16x1xf32>
      tpu.vector_store %arg7[%c0_23, %c0_24], %34 {strides = array<i32>} : memref<16x1xf32, #tpu.memory_space<vmem>>, vector<16x1xf32>,
    } else {
    }
    %c0 = arith.constant 0 : index
    %c0_1 = arith.constant 0 : index
    %3 = vector.load %arg2[%c0, %c0_1] : memref<16x32xbf16, #tpu.memory_space<vmem>>, vector<16x32xbf16>
    %c0_2 = arith.constant 0 : index
    %c0_3 = arith.constant 0 : index
    %4 = vector.load %arg3[%c0_2, %c0_3] : memref<128x32xbf16, #tpu.memory_space<vmem>>, vector<128x32xbf16>
    %cst = arith.constant dense<0.000000e+00> : vector<16x128xf32>
    %5 = tpu.matmul %3, %4, %cst {dimension_numbers = #tpu.dot_dimension_numbers<[1], [1], [0], [0], [0, 0, 1, 0], [], []>} : vector<16x32xbf16>, vector<128x32xbf16>, vector<16x128xf32> -> vector<16x128xf32>
    %c0_4 = arith.constant 0 : index
    %c0_5 = arith.constant 0 : index
    %6 = vector.load %arg4[%c0_4, %c0_5] : memref<1x128xf32, #tpu.memory_space<vmem>>, vector<1x128xf32>
    %7 = vector.broadcast %6 : vector<1x128xf32> to vector<16x128xf32>
    %8 = arith.addf %5, %7 : vector<16x128xf32>
    %c128_i32 = arith.constant 128 : i32
    %9 = arith.muli %arg1, %c128_i32 : i32
    %10 = tpu.assume_multiple %9, 128 : i32
    %c0_6 = arith.constant 0 : index
    %11 = arith.index_cast %10 : i32 to index
    %12 = vector.load %arg5[%c0_6, %11] : memref<16x128xf32, #tpu.memory_space<vmem>>, vector<16x128xf32>
    tpu.vector_store %arg5[%c0_6, %11], %8 {strides = array<i32>} : memref<16x128xf32, #tpu.memory_space<vmem>>, vector<16x128xf32>,
    %c0_7 = arith.constant 0 : index
    %c0_8 = arith.constant 0 : index
    %13 = vector.load %arg6[%c0_7, %c0_8] : memref<16x1xf32, #tpu.memory_space<vmem>>, vector<16x1xf32>
    %cst_9 = arith.constant dense<0xFF800000> : vector<16xf32>
    %14 = vector.multi_reduction <maximumf>, %8, %cst_9 [1] : vector<16x128xf32> to vector<16xf32>
    %15 = vector.shape_cast %14 : vector<16xf32> to vector<16x1xf32>
    %16 = arith.maximumf %13, %15 : vector<16x1xf32>
    %c0_10 = arith.constant 0 : index
    %c0_11 = arith.constant 0 : index
    %17 = vector.load %arg7[%c0_10, %c0_11] : memref<16x1xf32, #tpu.memory_space<vmem>>, vector<16x1xf32>
    %18 = arith.subf %13, %16 : vector<16x1xf32>
    %19 = math.exp %18 : vector<16x1xf32>
    %20 = arith.mulf %17, %19 : vector<16x1xf32>
    %21 = vector.broadcast %16 : vector<16x1xf32> to vector<16x128xf32>
    %22 = arith.subf %8, %21 : vector<16x128xf32>
    %23 = math.exp %22 : vector<16x128xf32>
    %cst_12 = arith.constant dense<0.000000e+00> : vector<16xf32>
    %24 = vector.multi_reduction <add>, %23, %cst_12 [1] : vector<16x128xf32> to vector<16xf32>
    %25 = vector.shape_cast %24 : vector<16xf32> to vector<16x1xf32>
    %26 = arith.addf %20, %25 : vector<16x1xf32>
    %c0_13 = arith.constant 0 : index
    %c0_14 = arith.constant 0 : index
    %27 = vector.load %arg7[%c0_13, %c0_14] : memref<16x1xf32, #tpu.memory_space<vmem>>, vector<16x1xf32>
    tpu.vector_store %arg7[%c0_13, %c0_14], %26 {strides = array<i32>} : memref<16x1xf32, #tpu.memory_space<vmem>>, vector<16x1xf32>,
    %c0_15 = arith.constant 0 : index
    %c0_16 = arith.constant 0 : index
    %28 = vector.load %arg6[%c0_15, %c0_16] : memref<16x1xf32, #tpu.memory_space<vmem>>, vector<16x1xf32>
    tpu.vector_store %arg6[%c0_15, %c0_16], %16 {strides = array<i32>} : memref<16x1xf32, #tpu.memory_space<vmem>>, vector<16x1xf32>,
    %c0_i32_17 = arith.constant 0 : i32
    %29 = arith.cmpi eq, %arg1, %c0_i32_17 : i32
    %30 = arith.extui %29 : i1 to i32
    %c0_i32_18 = arith.constant 0 : i32
    %31 = arith.cmpi ne, %30, %c0_i32_18 : i32
    scf.if %31 {
      %c0_19 = arith.constant 0 : index
      %c0_20 = arith.constant 0 : index
      %32 = vector.load %arg6[%c0_19, %c0_20] : memref<16x1xf32, #tpu.memory_space<vmem>>, vector<16x1xf32>
      %c0_21 = arith.constant 0 : index
      %c0_22 = arith.constant 0 : index
      %33 = vector.load %arg7[%c0_21, %c0_22] : memref<16x1xf32, #tpu.memory_space<vmem>>, vector<16x1xf32>
      %34 = math.log %33 : vector<16x1xf32>
      %35 = arith.addf %32, %34 : vector<16x1xf32>
      %c0_23 = arith.constant 0 : index
      %c0_24 = arith.constant 0 : index
      %36 = vector.load %arg5[%c0_23, %c0_24] : memref<16x128xf32, #tpu.memory_space<vmem>>, vector<16x128xf32>
      %37 = vector.broadcast %35 : vector<16x1xf32> to vector<16x128xf32>
      %38 = arith.subf %36, %37 : vector<16x128xf32>
      %c0_25 = arith.constant 0 : index
      %c0_26 = arith.constant 0 : index
      %39 = vector.load %arg5[%c0_25, %c0_26] : memref<16x128xf32, #tpu.memory_space<vmem>>, vector<16x128xf32>
      tpu.vector_store %arg5[%c0_25, %c0_26], %38 {strides = array<i32>} : memref<16x128xf32, #tpu.memory_space<vmem>>, vector<16x128xf32>,
    } else {
    }
    return
  }
  func.func @transform_0(%arg0: i32, %arg1: i32) -> (i32, i32) {
    %c0_i32 = arith.constant 0 : i32
    %c0_i32_0 = arith.constant 0 : i32
    return %arg0, %c0_i32 : i32, i32
  }
  func.func @transform_1(%arg0: i32, %arg1: i32) -> (i32, i32) {
    %c0_i32 = arith.constant 0 : i32
    %c0_i32_0 = arith.constant 0 : i32
    return %arg1, %c0_i32 : i32, i32
  }
  func.func @transform_2(%arg0: i32, %arg1: i32) -> (i32, i32) {
    %c0_i32 = arith.constant 0 : i32
    %c0_i32_0 = arith.constant 0 : i32
    return %c0_i32, %arg1 : i32, i32
  }
  func.func @transform_3(%arg0: i32, %arg1: i32) -> (i32, i32) {
    %c0_i32 = arith.constant 0 : i32
    %c0_i32_0 = arith.constant 0 : i32
    return %arg0, %c0_i32 : i32, i32
  }
}

</mosaic_0001>

<llo_original>
// kernel: tpu_custom_call.1
$region0: #{tpu_custom_call.1}
  #allocation0 [shape = 'u32[]', space=smem, size = 0x4, offset = 0x4, fixed_abs, tag = 'smem constant byte address 0x4 - core index']
  #allocation1 [shape = 'u32[144,128]{1,0:T(1,128)}', space=vmem, size = 0x12000, scoped, tag = 'internal scratch']
  #allocation2 [shape = 'f32[16,1]{1,0:T(8,128)}', space=vmem, size = 0x2000, scoped, tag = 'scratch operand']
  #allocation3 [shape = 'f32[16,1]{1,0:T(8,128)}', space=vmem, size = 0x2000, scoped, tag = 'scratch operand']
  %s0 = inlined_call_operand.vmem [shape: bf16[16,32], index: 0, kind: input, shape index: {}]
  %s1 = inlined_call_operand.vmem [shape: bf16[128,32], index: 1, kind: input, shape index: {}]
  %s2 = inlined_call_operand.vmem [shape: f32[1,128], index: 2, kind: input, shape index: {}]
  %s3 = inlined_call_operand.hbm [shape: f32[16,128], index: 3, kind: output, shape index: {}]
  %s4 = sld [smem:[#allocation0]]
  $region30: #{tpu_custom_call.1} parent=0
    _
  %s6 = ssub.s32 1, %s4
  %s7 = scalar_select 0, %s6, %s4
  $region1: #{tpu_custom_call.1} parent=0
    #allocation4 [shape = 'u8[8192]{0}', space=vmem, size = 0x2000, scoped, tag = 'output window, operand 0, single buffered']
    #allocation5 [shape = 's32[1]{0}', space=sflag, size = 0x4, scoped, tag = 'scoped memory for tpu_custom_call.1']
    %8 = vsyncpa [#allocation5], 0
    // Predicated region
    $region2: #{tpu_custom_call.1} parent=1 // pred_check
      _
    $region3: #{tpu_custom_call.1} parent=1 // pred_check_branch
      %10 = sbr.rel (0) target = $region5
    $region4: #{tpu_custom_call.1} parent=1 // pred_region
      _
    $region5: #{tpu_custom_call.1} parent=1 // pred_fallthru
      _
    // Predicated region
    $region6: #{tpu_custom_call.1} parent=1 // pred_check
      _
    $region7: #{tpu_custom_call.1} parent=1 // pred_check_branch
      %12 = sbr.rel (0) target = $region9
    $region8: #{tpu_custom_call.1} parent=1 // pred_region
      _
    $region9: #{tpu_custom_call.1} parent=1 // pred_fallthru
      _
    // Predicated region
    $region10: #{tpu_custom_call.1} parent=1 // pred_check
      _
    $region11: #{tpu_custom_call.1} parent=1 // pred_check_branch
      %14 = sbr.rel (0) target = $region13
    $region12: #{tpu_custom_call.1} parent=1 // pred_region
      _
    $region13: #{tpu_custom_call.1} parent=1 // pred_fallthru
      _
    %p16 = scmp.eq.s32.totalorder 0, 0
    // Predicated region
    $region14: #{tpu_custom_call.1} parent=1 // pred_check
      %p17 = pneg %p16
    $region15: #{tpu_custom_call.1} parent=1 // pred_check_branch
      %19 = sbr.rel (%p17) target = $region17
    $region16: #{tpu_custom_call.1} parent=1 // pred_region
      %vm20 = vcmask 7168
      %21 = vst.msk [vmem:[#allocation2] sm:$0xff] %vm20, -inf
      %22 = vst.msk [vmem:[#allocation2 + $0x8] sm:$0xff] %vm20, -inf
      %23 = vst.msk [vmem:[#allocation3] sm:$0xff] %vm20, 0.0
      %24 = vst.msk [vmem:[#allocation3 + $0x8] sm:$0xff] %vm20, 0.0
    $region17: #{tpu_custom_call.1} parent=1 // pred_fallthru
      _
    %v25 = vld [vmem:[%s0] sm:$0xf]
    %v26 = vld [vmem:[%s0 + $0x4] sm:$0xf]
    %v27 = vld [vmem:[%s1] sm:$0xf]
    %v28 = vld [vmem:[%s1 + $0x4] sm:$0xf]
    %v29 = vld [vmem:[%s1 + $0x8] sm:$0xf]
    %v30 = vld [vmem:[%s1 + $0xc] sm:$0xf]
    %v31 = vld [vmem:[%s1 + $0x10] sm:$0xf]
    %v32 = vld [vmem:[%s1 + $0x14] sm:$0xf]
    %v33 = vld [vmem:[%s1 + $0x18] sm:$0xf]
    %v34 = vld [vmem:[%s1 + $0x1c] sm:$0xf]
    %v35 = vld [vmem:[%s1 + $0x20] sm:$0xf]
    %v36 = vld [vmem:[%s1 + $0x24] sm:$0xf]
    %v37 = vld [vmem:[%s1 + $0x28] sm:$0xf]
    %v38 = vld [vmem:[%s1 + $0x2c] sm:$0xf]
    %v39 = vld [vmem:[%s1 + $0x30] sm:$0xf]
    %v40 = vld [vmem:[%s1 + $0x34] sm:$0xf]
    %v41 = vld [vmem:[%s1 + $0x38] sm:$0xf]
    %v42 = vld [vmem:[%s1 + $0x3c] sm:$0xf]
    %v43 = vld [vmem:[%s2] sm:$0x1]
    %v45 = vlaneseq
    %v46 = vshrl.u32 %v45, 7
    %v47 = vsub.s32 0, %v46
    %v48 = vrot.slane %v43, %v47
    %v52 = vunpack.c.l.b16 %v25
    %v53 = vunpack.c.l.b16 %v26
    %v54 = vpack.c.b16 %v53, %v52
    %v71 = vunpack.c.l.b16 %v27
    %v72 = vunpack.c.l.b16 %v28
    %v73 = vunpack.c.l.b16 %v29
    %v74 = vunpack.c.l.b16 %v30
    %v75 = vunpack.c.l.b16 %v31
    %v76 = vunpack.c.l.b16 %v32
    %v77 = vunpack.c.l.b16 %v33
    %v78 = vunpack.c.l.b16 %v34
    %v79 = vunpack.c.l.b16 %v35
    %v80 = vunpack.c.l.b16 %v36
    %v81 = vunpack.c.l.b16 %v37
    %v82 = vunpack.c.l.b16 %v38
    %v83 = vunpack.c.l.b16 %v39
    %v84 = vunpack.c.l.b16 %v40
    %v85 = vunpack.c.l.b16 %v41
    %v86 = vunpack.c.l.b16 %v42
    %v87 = vpack.c.b16 %v72, %v71
    %v88 = vpack.c.b16 %v74, %v73
    %v89 = vpack.c.b16 %v76, %v75
    %v90 = vpack.c.b16 %v78, %v77
    %v91 = vpack.c.b16 %v80, %v79
    %v92 = vpack.c.b16 %v82, %v81
    %v93 = vpack.c.b16 %v84, %v83
    %v94 = vpack.c.b16 %v86, %v85
    %vm95 = vcmask 261120
    %v97 = vsel %vm95, %v54, 0
    %v100 = vsel %vm95, %v87, 0
    %v103 = vsel %vm95, %v88, 0
    %v106 = vsel %vm95, %v89, 0
    %v109 = vsel %vm95, %v90, 0
    %v112 = vsel %vm95, %v91, 0
    %v115 = vsel %vm95, %v92, 0
    %v118 = vsel %vm95, %v93, 0
    %v121 = vsel %vm95, %v94, 0
    %123 = vmatprep.subr.bf16.mxu0 0
    %124 = vmatpush1.bf16.xpose.msra.mxu0 %v100
    %125 = vmatprep.subr.bf16.mxu0 0
    %126 = vmatpush1.bf16.xpose.msra.mxu0 %v103
    %127 = vmatprep.subr.bf16.mxu0 0
    %128 = vmatpush1.bf16.xpose.msra.mxu0 %v106
    %129 = vmatprep.subr.bf16.mxu0 0
    %130 = vmatpush1.bf16.xpose.msra.mxu0 %v109
    %131 = vmatprep.subr.bf16.mxu0 0
    %132 = vmatpush1.bf16.xpose.msra.mxu0 %v112
    %133 = vmatprep.subr.bf16.mxu0 0
    %134 = vmatpush1.bf16.xpose.msra.mxu0 %v115
    %135 = vmatprep.subr.bf16.mxu0 0
    %136 = vmatpush1.bf16.xpose.msra.mxu0 %v118
    %137 = vmatprep.subr.bf16.mxu0 0
    %138 = vmatpush1.bf16.xpose.msra.mxu0 %v121
    %139 = vmatprep.subr.bf16.mxu0 0
    %140 = vmatpush1.bf16.xpose.msra.mxu0 0
    %141 = vmatprep.subr.bf16.mxu0 0
    %142 = vmatpush1.bf16.xpose.msra.mxu0 0
    %143 = vmatprep.subr.bf16.mxu0 0
    %144 = vmatpush1.bf16.xpose.msra.mxu0 0
    %145 = vmatprep.subr.bf16.mxu0 0
    %146 = vmatpush1.bf16.xpose.msra.mxu0 0
    %147 = vmatprep.subr.bf16.mxu0 0
    %148 = vmatpush1.bf16.xpose.msra.mxu0 0
    %149 = vmatprep.subr.bf16.mxu0 0
    %150 = vmatpush1.bf16.xpose.msra.mxu0 0
    %151 = vmatprep.subr.bf16.mxu0 0
    %152 = vmatpush1.bf16.xpose.msra.mxu0 0
    %153 = vmatprep.subr.bf16.mxu0 0
    %154 = vmatpush1.bf16.xpose.msra.mxu0 0
    %155 = vmatprep.mubr.bf16.mxu0 0
    %156 = vmatmul.mubr.bf16.gmra.mrb[0].mxu0 %v97
    %v157 = vpop.f32.mrb[0].mxu0
    %v158 = vadd.f32 %v48, %v157
    %v159 = vpop.f32.mrb[0].mxu0
    %v160 = vpop.f32.mrb[0].mxu0
    %v161 = vadd.f32 %v48, %v160
    %v162 = vpop.f32.mrb[0].mxu0
    %163 = vdwg.mxu0
    %s164 = smul.u32 0, 128
    %s165 = sshra.s32 %s164, 7
    %s166 = sand.u32 %s164, 127
    %s167 = scalar_lea.vmem [#allocation4], %s165
    %168 = vst [vmem:[%s167] sm:$0xff] %v158
    %169 = vst [vmem:[%s167 + $0x8] sm:$0xff] %v161
    %v170 = vld [vmem:[#allocation2] sm:$0xff]
    %v171 = vld [vmem:[#allocation2 + $0x8] sm:$0xff]
    %172 = vmax.xlane.f32.xlu0 %v158
    %v173 = vpop.xlane.xlu0 %172
    %174 = vmax.xlane.f32.xlu0 %v161
    %v175 = vpop.xlane.xlu0 %174
    %v176 = vmax.f32 %v170, %v173
    %v177 = vmax.f32 %v171, %v175
    %v178 = vld [vmem:[#allocation3] sm:$0xff]
    %v179 = vld [vmem:[#allocation3 + $0x8] sm:$0xff]
    %v180 = vsub.f32 %v170, %v176
    %v181 = vsub.f32 %v171, %v177
    %v182 = vmul.f32 %v180, 1.442695
    %v183 = vpow.pop %v182
    %v184 = vmul.f32 %v181, 1.442695
    %v185 = vpow.pop %v184
    %v186 = vmul.f32 %v178, %v183
    %v187 = vmul.f32 %v179, %v185
    %189 = vset.pattern.permute.xlu0 0
    %190 = vperm.xlu0 %189, %v176
    %v191 = vpop.permute.xlu0 %190
    %194 = vset.pattern.permute.xlu0 0
    %195 = vperm.xlu0 %194, %v177
    %v196 = vpop.permute.xlu0 %195
    %v198 = vsub.f32 %v158, %v191
    %v199 = vsub.f32 %v161, %v196
    %v200 = vmul.f32 %v198, 1.442695
    %v201 = vpow.pop %v200
    %v202 = vmul.f32 %v199, 1.442695
    %v203 = vpow.pop %v202
    %204 = vadd.xlane.f32.xlu0 %v201
    %v205 = vpop.xlane.xlu0 %204
    %206 = vadd.xlane.f32.xlu0 %v203
    %v207 = vpop.xlane.xlu0 %206
    %v208 = vadd.f32 %v186, %v205
    %v209 = vadd.f32 %v187, %v207
    %vm210 = vcmask 7168
    %211 = vst.msk [vmem:[#allocation3] sm:$0xff] %vm210, %v208
    %212 = vst.msk [vmem:[#allocation3 + $0x8] sm:$0xff] %vm210, %v209
    %213 = vst.msk [vmem:[#allocation2] sm:$0xff] %vm210, %v176
    %214 = vst.msk [vmem:[#allocation2 + $0x8] sm:$0xff] %vm210, %v177
    // Predicated region
    $region18: #{tpu_custom_call.1} parent=1 // pred_check
      %p215 = pneg %p16
    $region19: #{tpu_custom_call.1} parent=1 // pred_check_branch
      %217 = sbr.rel (%p215) target = $region21
    $region20: #{tpu_custom_call.1} parent=1 // pred_region
      %v218 = vld [vmem:[#allocation2] sm:$0xff]
      %v219 = vld [vmem:[#allocation2 + $0x8] sm:$0xff]
      %v220 = vld [vmem:[#allocation3] sm:$0xff]
      %v221 = vld [vmem:[#allocation3 + $0x8] sm:$0xff]
      %v222 = vlog2.pop %v220
      %v223 = vmul.f32 %v222, 0.6931472
      %v224 = vlog2.pop %v221
      %v225 = vmul.f32 %v224, 0.6931472
      %v226 = vadd.f32 %v218, %v223
      %v227 = vadd.f32 %v219, %v225
      %v228 = vld [vmem:[#allocation4] sm:$0xff]
      %v229 = vld [vmem:[#allocation4 + $0x8] sm:$0xff]
      %231 = vset.pattern.permute.xlu0 0
      %232 = vperm.xlu0 %231, %v226
      %v233 = vpop.permute.xlu0 %232
      %236 = vset.pattern.permute.xlu0 0
      %237 = vperm.xlu0 %236, %v227
      %v238 = vpop.permute.xlu0 %237
      %v240 = vsub.f32 %v228, %v233
      %v241 = vsub.f32 %v229, %v238
      %242 = vst [vmem:[#allocation4] sm:$0xff] %v240
      %243 = vst [vmem:[#allocation4 + $0x8] sm:$0xff] %v241
    $region21: #{tpu_custom_call.1} parent=1 // pred_fallthru
      _
    // Predicated region
    $region22: #{tpu_custom_call.1} parent=1 // pred_check
      _
    $region23: #{tpu_custom_call.1} parent=1 // pred_check_branch
      %245 = sbr.rel (0) target = $region25
    $region24: #{tpu_custom_call.1} parent=1 // pred_region
      %s247 = ssub.s32 256, 256
      %248 = vsyncadd [#allocation5], %s247
      %s249 = sshll.u32 [#allocation4], 4
      %s250 = int_to_ptr.vmem [resolvable:$true] %s249
      %255 = dma.vmem_to_hbm [thread:$0]  %s250, 256, %s3, [#allocation5], 128, 128, 8
    $region25: #{tpu_custom_call.1} parent=1 // pred_fallthru
      _
    // Predicated region
    $region26: #{tpu_custom_call.1} parent=1 // pred_check
      _
    $region27: #{tpu_custom_call.1} parent=1 // pred_check_branch
      %257 = sbr.rel (0) target = $region29
    $region28: #{tpu_custom_call.1} parent=1 // pred_region
      %258 = dma.done [#allocation5], 256
    $region29: #{tpu_custom_call.1} parent=1 // pred_fallthru
      _
    %259 = vsyncpa [#allocation5], 1

</llo_original>
